<compile_context>
chip_gen: v6e
topology: v6e:2x2x1
jax: 0.10.0
libtpu: 0.0.40
codegen_flags: <defaults>
</compile_context>

<pallas_src>
import functools

import jax
import jax.numpy as jnp
import numpy as np
from jax.experimental import pallas as pl
from jax.experimental.pallas import tpu as pltpu

HIDDEN = 50            # logical width of the torch model
H_PAD = 64             # sublane-padded hidden width (multiple of 8 / 16)
OUT = 4
OUT_PAD = 8            # sublane-padded output rows
LANE = 128
DEFAULT_MAX_TILE = 8192  # batch lanes per grid step


def _round_up(n, m):
    return ((n + m - 1) // m) * m


def pick_compute_dtype():
    """bf16 elementwise tail only where the VPU/EUP have a bf16 path."""
    try:
        kind = jax.devices()[0].device_kind.lower()
    except Exception:
        return jnp.float32
    if any(tag in kind for tag in ("v6", "v7", "7x")):
        return jnp.bfloat16
    return jnp.float32   # v5e/v5p/v4/...: keep all elementwise math in f32


def pinn_kernel(act_dtype, t_ref, x_ref, w1t_ref, w1x_ref, b1_ref,
                w2t_ref, b2_ref, w3t_ref, b3_ref, wot_ref, bo_ref, out_ref):
    t = t_ref[...]                              # (1, TILE) f32, lane-dense
    x = x_ref[...]                              # (1, TILE) f32
    # Layer 1 (2 -> H_PAD) on the VPU: two outer products + bias, then tanh.
    z1 = w1t_ref[...] * t + w1x_ref[...] * x + b1_ref[...]   # (H_PAD, TILE) f32
    h1 = jnp.tanh(z1.astype(act_dtype))
    # Layers 2/3 on the MXU with W^T resident; f32 accumulation.
    # In the bf16 path the pre-activation is cast to bf16 BEFORE the bias add
    # and tanh, so EUP/VPU work runs on packed bf16 vregs and the tanh output
    # is already the next MXU input (no separate cast pass).
    z2 = jnp.dot(w2t_ref[...], h1, preferred_element_type=jnp.float32)
    h2 = jnp.tanh(z2.astype(act_dtype) + b2_ref[...])
    z3 = jnp.dot(w3t_ref[...], h2, preferred_element_type=jnp.float32)
    h3 = jnp.tanh(z3.astype(act_dtype) + b3_ref[...])
    # Output layer (H_PAD -> OUT_PAD); bias add in f32.
    zo = jnp.dot(wot_ref[...], h3, preferred_element_type=jnp.float32)
    out_ref[...] = (zo + bo_ref[...]).astype(out_ref.dtype)


def init_params(key):
    """torch.nn.Linear-style init; weights stored as (in_features, out_features)."""
    def linear(k, fan_in, fan_out):
        kw, kb = jax.random.split(k)
        bound = 1.0 / np.sqrt(fan_in)
        w = jax.random.uniform(kw, (fan_in, fan_out), jnp.float32, -bound, bound)
        b = jax.random.uniform(kb, (1, fan_out), jnp.float32, -bound, bound)
        return w, b

    keys = jax.random.split(key, 4)
    w1, b1 = linear(keys[0], 2, HIDDEN)
    w2, b2 = linear(keys[1], HIDDEN, HIDDEN)
    w3, b3 = linear(keys[2], HIDDEN, HIDDEN)
    wo, bo = linear(keys[3], HIDDEN, OUT)
    return (w1, b1, w2, b2, w3, b3, wo, bo)


def pad_params(params, compute_dtype=jnp.float32):
    """Transpose + zero-pad weights once to the sublane-aligned layout.

    compute_dtype is the elementwise/MXU-input dtype (bf16 on v6e/v7x, f32 on
    v5e).  Layer-1 weights, b1 and bo stay f32.
    NOTE: if this forward feeds PINN residual/derivative losses, pass
    compute_dtype=jnp.float32 to keep W2/W3/Wo in f32 (MXU has ample slack).
    """
    w1, b1, w2, b2, w3, b3, wo, bo = params

    def pad2(a, shape, dtype):
        out = jnp.zeros(shape, dtype)
        return out.at[:a.shape[0], :a.shape[1]].set(a.astype(dtype))

    w1t = pad2(w1[0:1, :].T, (H_PAD, 1), jnp.float32)      # t column of W1^T
    w1x = pad2(w1[1:2, :].T, (H_PAD, 1), jnp.float32)      # x column of W1^T
    b1p = pad2(b1.T, (H_PAD, 1), jnp.float32)
    w2t = pad2(w2.T, (H_PAD, H_PAD), compute_dtype)
    b2p = pad2(b2.T, (H_PAD, 1), compute_dtype)
    w3t = pad2(w3.T, (H_PAD, H_PAD), compute_dtype)
    b3p = pad2(b3.T, (H_PAD, 1), compute_dtype)
    wot = pad2(wo.T, (OUT_PAD, H_PAD), compute_dtype)
    bop = pad2(bo.T, (OUT_PAD, 1), jnp.float32)
    return (w1t, w1x, b1p, w2t, b2p, w3t, b3p, wot, bop)


def _choose_tiling(n, max_tile):
    g = pl.cdiv(n, max_tile)
    if g == 1 and n >= 2 * LANE:
        g = 2                      # >=2 grid steps so v7x's two TCs both work
    tile = _round_up(pl.cdiv(n, g), LANE)   # minimizes dead-row padding
    return g, tile, g * tile


def pinn_forward(t, x, padded_params, max_tile=DEFAULT_MAX_TILE):
    (w1t, w1x, b1p, w2t, b2p, w3t, b3p, wot, bop) = padded_params
    n = t.shape[0]
    g, tile, n_pad = _choose_tiling(n, max_tile)

    def as_row(a):
        row = jnp.reshape(a.astype(jnp.float32), (1, -1))   # (n,1) -> (1,n), free
        if n_pad == n:
            return row
        return jnp.zeros((1, n_pad), jnp.float32).at[:, :n].set(row)

    t_p = as_row(t)
    x_p = as_row(x)

    row_spec = pl.BlockSpec((1, tile), lambda i: (0, i))

    def resident(shape):
        # Same block index every grid step -> fetched once, stays in VMEM.
        return pl.BlockSpec(shape, lambda i: (0, 0))

    kernel = functools.partial(pinn_kernel, w2t.dtype)   # act dtype == W2^T dtype

    out = pl.pallas_call(
        kernel,
        out_shape=jax.ShapeDtypeStruct((OUT_PAD, n_pad), jnp.float32),
        grid=(g,),
        in_specs=[
            row_spec, row_spec,
            resident((H_PAD, 1)), resident((H_PAD, 1)), resident((H_PAD, 1)),
            resident((H_PAD, H_PAD)), resident((H_PAD, 1)),
            resident((H_PAD, H_PAD)), resident((H_PAD, 1)),
            resident((OUT_PAD, H_PAD)), resident((OUT_PAD, 1)),
        ],
        out_specs=pl.BlockSpec((OUT_PAD, tile), lambda i: (0, i)),
        compiler_params=pltpu.CompilerParams(
            dimension_semantics=("parallel",),
            # ~6-14 MiB live per step with the lane-dense layout; 32 MiB is
            # ample and safe on every generation (incl. v7x's 64 MiB VMEM).
            vmem_limit_bytes=32 * 1024 * 1024,
        ),
    )(t_p, x_p, w1t, w1x, b1p, w2t, b2p, w3t, b3p, wot, bop)
    return out[:OUT, :n].T       # lane-dense slab -> (n, 4), plumbing only


def pinn_reference(t, x, params):
    w1, b1, w2, b2, w3, b3, wo, bo = params
    inputs = jnp.concatenate(
        [t.astype(jnp.float32), x.astype(jnp.float32)], axis=1)
    h1 = jnp.tanh(inputs @ w1 + b1)
    h2 = jnp.tanh(h1 @ w2 + b2)
    h3 = jnp.tanh(h2 @ w3 + b3)
    return h3 @ wo + bo


if __name__ == "__main__":
    key = jax.random.PRNGKey(0)
    k_params, k_t, k_x, k_t2, k_x2 = jax.random.split(key, 5)

    compute_dtype = pick_compute_dtype()
    params = init_params(k_params)
    padded = pad_params(params, compute_dtype)

    if compute_dtype == jnp.bfloat16:
        rtol, atol = 2e-2, 3e-2      # bf16 tanh + bf16 MXU inputs
    else:
        rtol, atol = 1e-4, 1e-4      # pure f32 path

    # Small, single-tile check.
    n_small = 8
    t_s = jax.random.uniform(k_t, (n_small, 1), jnp.float32)
    x_s = jax.random.uniform(k_x, (n_small, 1), jnp.float32)
    out_s = jax.block_until_ready(pinn_forward(t_s, x_s, padded))
    ref_s = jax.block_until_ready(pinn_reference(t_s, x_s, params))
    np.testing.assert_allclose(np.asarray(out_s), np.asarray(ref_s),
                               rtol=rtol, atol=atol)

    # Multi-tile check: 3 grid steps, ragged-tail padding, parallel batch axis.
    n_mid = 300
    t_m = jax.random.uniform(k_t2, (n_mid, 1), jnp.float32)
    x_m = jax.random.uniform(k_x2, (n_mid, 1), jnp.float32)
    out_m = jax.block_until_ready(pinn_forward(t_m, x_m, padded, max_tile=128))
    ref_m = jax.block_until_ready(pinn_reference(t_m, x_m, params))
    np.testing.assert_allclose(np.asarray(out_m), np.asarray(ref_m),
                               rtol=rtol, atol=atol)

    print("KERNEL_OK")
</pallas_src>

<mosaic_0001>
module attributes {stable_mosaic.version = 11 : i64} {
  func.func @pinn_kernel(%arg0: i32, %arg1: memref<1x128xf32, #tpu.memory_space<vmem>>, %arg2: memref<1x128xf32, #tpu.memory_space<vmem>>, %arg3: memref<64x1xf32, #tpu.memory_space<vmem>>, %arg4: memref<64x1xf32, #tpu.memory_space<vmem>>, %arg5: memref<64x1xf32, #tpu.memory_space<vmem>>, %arg6: memref<64x64xf32, #tpu.memory_space<vmem>>, %arg7: memref<64x1xf32, #tpu.memory_space<vmem>>, %arg8: memref<64x64xf32, #tpu.memory_space<vmem>>, %arg9: memref<64x1xf32, #tpu.memory_space<vmem>>, %arg10: memref<8x64xf32, #tpu.memory_space<vmem>>, %arg11: memref<8x1xf32, #tpu.memory_space<vmem>>, %arg12: memref<8x128xf32, #tpu.memory_space<vmem>>) attributes {dimension_semantics = [#tpu.dimension_semantics<parallel>], iteration_bounds = array<i64: 1>, scalar_prefetch = 0 : i64, scratch_operands = 0 : i64, tpu.core_type = #tpu.core_type<tc>, window_params = [{transform_indices = @transform_0, window_bounds = array<i64: 1, 128>}, {transform_indices = @transform_1, window_bounds = array<i64: 1, 128>}, {pipeline_mode = #tpu.pipeline_mode<synchronous>, transform_indices = @transform_2, window_bounds = array<i64: 64, 1>}, {pipeline_mode = #tpu.pipeline_mode<synchronous>, transform_indices = @transform_3, window_bounds = array<i64: 64, 1>}, {pipeline_mode = #tpu.pipeline_mode<synchronous>, transform_indices = @transform_4, window_bounds = array<i64: 64, 1>}, {pipeline_mode = #tpu.pipeline_mode<synchronous>, transform_indices = @transform_5, window_bounds = array<i64: 64, 64>}, {pipeline_mode = #tpu.pipeline_mode<synchronous>, transform_indices = @transform_6, window_bounds = array<i64: 64, 1>}, {pipeline_mode = #tpu.pipeline_mode<synchronous>, transform_indices = @transform_7, window_bounds = array<i64: 64, 64>}, {pipeline_mode = #tpu.pipeline_mode<synchronous>, transform_indices = @transform_8, window_bounds = array<i64: 64, 1>}, {pipeline_mode = #tpu.pipeline_mode<synchronous>, transform_indices = @transform_9, window_bounds = array<i64: 8, 64>}, {pipeline_mode = #tpu.pipeline_mode<synchronous>, transform_indices = @transform_10, window_bounds = array<i64: 8, 1>}, {transform_indices = @transform_11, window_bounds = array<i64: 8, 128>}]} {
    %c0 = arith.constant 0 : index
    %c0_0 = arith.constant 0 : index
    %0 = vector.load %arg1[%c0, %c0_0] : memref<1x128xf32, #tpu.memory_space<vmem>>, vector<1x128xf32>
    %c0_1 = arith.constant 0 : index
    %c0_2 = arith.constant 0 : index
    %1 = vector.load %arg2[%c0_1, %c0_2] : memref<1x128xf32, #tpu.memory_space<vmem>>, vector<1x128xf32>
    %c0_3 = arith.constant 0 : index
    %c0_4 = arith.constant 0 : index
    %2 = vector.load %arg3[%c0_3, %c0_4] : memref<64x1xf32, #tpu.memory_space<vmem>>, vector<64x1xf32>
    %3 = vector.broadcast %2 : vector<64x1xf32> to vector<64x128xf32>
    %4 = vector.broadcast %0 : vector<1x128xf32> to vector<64x128xf32>
    %5 = arith.mulf %3, %4 : vector<64x128xf32>
    %c0_5 = arith.constant 0 : index
    %c0_6 = arith.constant 0 : index
    %6 = vector.load %arg4[%c0_5, %c0_6] : memref<64x1xf32, #tpu.memory_space<vmem>>, vector<64x1xf32>
    %7 = vector.broadcast %6 : vector<64x1xf32> to vector<64x128xf32>
    %8 = vector.broadcast %1 : vector<1x128xf32> to vector<64x128xf32>
    %9 = arith.mulf %7, %8 : vector<64x128xf32>
    %10 = arith.addf %5, %9 : vector<64x128xf32>
    %c0_7 = arith.constant 0 : index
    %c0_8 = arith.constant 0 : index
    %11 = vector.load %arg5[%c0_7, %c0_8] : memref<64x1xf32, #tpu.memory_space<vmem>>, vector<64x1xf32>
    %12 = vector.broadcast %11 : vector<64x1xf32> to vector<64x128xf32>
    %13 = arith.addf %10, %12 : vector<64x128xf32>
    %14 = math.tanh %13 : vector<64x128xf32>
    %c0_9 = arith.constant 0 : index
    %c0_10 = arith.constant 0 : index
    %15 = vector.load %arg6[%c0_9, %c0_10] : memref<64x64xf32, #tpu.memory_space<vmem>>, vector<64x64xf32>
    %cst = arith.constant dense<0.000000e+00> : vector<64x128xf32>
    %16 = tpu.matmul %15, %14, %cst {dimension_numbers = #tpu.dot_dimension_numbers<[1], [0], [0], [1], [0, 0, 1, 1], [], []>} : vector<64x64xf32>, vector<64x128xf32>, vector<64x128xf32> -> vector<64x128xf32>
    %c0_11 = arith.constant 0 : index
    %c0_12 = arith.constant 0 : index
    %17 = vector.load %arg7[%c0_11, %c0_12] : memref<64x1xf32, #tpu.memory_space<vmem>>, vector<64x1xf32>
    %18 = vector.broadcast %17 : vector<64x1xf32> to vector<64x128xf32>
    %19 = arith.addf %16, %18 : vector<64x128xf32>
    %20 = math.tanh %19 : vector<64x128xf32>
    %c0_13 = arith.constant 0 : index
    %c0_14 = arith.constant 0 : index
    %21 = vector.load %arg8[%c0_13, %c0_14] : memref<64x64xf32, #tpu.memory_space<vmem>>, vector<64x64xf32>
    %cst_15 = arith.constant dense<0.000000e+00> : vector<64x128xf32>
    %22 = tpu.matmul %21, %20, %cst_15 {dimension_numbers = #tpu.dot_dimension_numbers<[1], [0], [0], [1], [0, 0, 1, 1], [], []>} : vector<64x64xf32>, vector<64x128xf32>, vector<64x128xf32> -> vector<64x128xf32>
    %c0_16 = arith.constant 0 : index
    %c0_17 = arith.constant 0 : index
    %23 = vector.load %arg9[%c0_16, %c0_17] : memref<64x1xf32, #tpu.memory_space<vmem>>, vector<64x1xf32>
    %24 = vector.broadcast %23 : vector<64x1xf32> to vector<64x128xf32>
    %25 = arith.addf %22, %24 : vector<64x128xf32>
    %26 = math.tanh %25 : vector<64x128xf32>
    %c0_18 = arith.constant 0 : index
    %c0_19 = arith.constant 0 : index
    %27 = vector.load %arg10[%c0_18, %c0_19] : memref<8x64xf32, #tpu.memory_space<vmem>>, vector<8x64xf32>
    %cst_20 = arith.constant dense<0.000000e+00> : vector<8x128xf32>
    %28 = tpu.matmul %27, %26, %cst_20 {dimension_numbers = #tpu.dot_dimension_numbers<[1], [0], [0], [1], [0, 0, 1, 1], [], []>} : vector<8x64xf32>, vector<64x128xf32>, vector<8x128xf32> -> vector<8x128xf32>
    %c0_21 = arith.constant 0 : index
    %c0_22 = arith.constant 0 : index
    %29 = vector.load %arg11[%c0_21, %c0_22] : memref<8x1xf32, #tpu.memory_space<vmem>>, vector<8x1xf32>
    %30 = vector.broadcast %29 : vector<8x1xf32> to vector<8x128xf32>
    %31 = arith.addf %28, %30 : vector<8x128xf32>
    %c0_23 = arith.constant 0 : index
    %c0_24 = arith.constant 0 : index
    %32 = vector.load %arg12[%c0_23, %c0_24] : memref<8x128xf32, #tpu.memory_space<vmem>>, vector<8x128xf32>
    tpu.vector_store %arg12[%c0_23, %c0_24], %31 {strides = array<i32>} : memref<8x128xf32, #tpu.memory_space<vmem>>, vector<8x128xf32>,
    return
  }
  func.func @transform_0(%arg0: i32) -> (i32, i32) {
    %c0_i32 = arith.constant 0 : i32
    %c0_i32_0 = arith.constant 0 : i32
    return %c0_i32, %arg0 : i32, i32
  }
  func.func @transform_1(%arg0: i32) -> (i32, i32) {
    %c0_i32 = arith.constant 0 : i32
    %c0_i32_0 = arith.constant 0 : i32
    return %c0_i32, %arg0 : i32, i32
  }
  func.func @transform_2(%arg0: i32) -> (i32, i32) {
    %c0_i32 = arith.constant 0 : i32
    %c0_i32_0 = arith.constant 0 : i32
    %c0_i32_1 = arith.constant 0 : i32
    return %c0_i32, %c0_i32_0 : i32, i32
  }
  func.func @transform_3(%arg0: i32) -> (i32, i32) {
    %c0_i32 = arith.constant 0 : i32
    %c0_i32_0 = arith.constant 0 : i32
    %c0_i32_1 = arith.constant 0 : i32
    return %c0_i32, %c0_i32_0 : i32, i32
  }
  func.func @transform_4(%arg0: i32) -> (i32, i32) {
    %c0_i32 = arith.constant 0 : i32
    %c0_i32_0 = arith.constant 0 : i32
    %c0_i32_1 = arith.constant 0 : i32
    return %c0_i32, %c0_i32_0 : i32, i32
  }
  func.func @transform_5(%arg0: i32) -> (i32, i32) {
    %c0_i32 = arith.constant 0 : i32
    %c0_i32_0 = arith.constant 0 : i32
    %c0_i32_1 = arith.constant 0 : i32
    return %c0_i32, %c0_i32_0 : i32, i32
  }
  func.func @transform_6(%arg0: i32) -> (i32, i32) {
    %c0_i32 = arith.constant 0 : i32
    %c0_i32_0 = arith.constant 0 : i32
    %c0_i32_1 = arith.constant 0 : i32
    return %c0_i32, %c0_i32_0 : i32, i32
  }
  func.func @transform_7(%arg0: i32) -> (i32, i32) {
    %c0_i32 = arith.constant 0 : i32
    %c0_i32_0 = arith.constant 0 : i32
    %c0_i32_1 = arith.constant 0 : i32
    return %c0_i32, %c0_i32_0 : i32, i32
  }
  func.func @transform_8(%arg0: i32) -> (i32, i32) {
    %c0_i32 = arith.constant 0 : i32
    %c0_i32_0 = arith.constant 0 : i32
    %c0_i32_1 = arith.constant 0 : i32
    return %c0_i32, %c0_i32_0 : i32, i32
  }
  func.func @transform_9(%arg0: i32) -> (i32, i32) {
    %c0_i32 = arith.constant 0 : i32
    %c0_i32_0 = arith.constant 0 : i32
    %c0_i32_1 = arith.constant 0 : i32
    return %c0_i32, %c0_i32_0 : i32, i32
  }
  func.func @transform_10(%arg0: i32) -> (i32, i32) {
    %c0_i32 = arith.constant 0 : i32
    %c0_i32_0 = arith.constant 0 : i32
    %c0_i32_1 = arith.constant 0 : i32
    return %c0_i32, %c0_i32_0 : i32, i32
  }
  func.func @transform_11(%arg0: i32) -> (i32, i32) {
    %c0_i32 = arith.constant 0 : i32
    %c0_i32_0 = arith.constant 0 : i32
    return %c0_i32, %arg0 : i32, i32
  }
}

</mosaic_0001>

<llo_original>
// kernel: tpu_custom_call.1
$region0: #{tpu_custom_call.1}
  #allocation0 [shape = 'u32[]', space=smem, size = 0x4, offset = 0x4, fixed_abs, tag = 'smem constant byte address 0x4 - core index']
  #allocation1 [shape = 'u32[144,128]{1,0:T(1,128)}', space=vmem, size = 0x12000, scoped, tag = 'internal scratch']
  %s0 = inlined_call_operand.vmem [shape: f32[1,128], index: 0, kind: input, shape index: {}]
  %s1 = inlined_call_operand.vmem [shape: f32[1,128], index: 1, kind: input, shape index: {}]
  %s2 = inlined_call_operand.vmem [shape: f32[64,1], index: 2, kind: input, shape index: {}]
  %s3 = inlined_call_operand.vmem [shape: f32[64,1], index: 3, kind: input, shape index: {}]
  %s4 = inlined_call_operand.vmem [shape: f32[64,1], index: 4, kind: input, shape index: {}]
  %s5 = inlined_call_operand.vmem [shape: f32[64,64], index: 5, kind: input, shape index: {}]
  %s6 = inlined_call_operand.vmem [shape: f32[64,1], index: 6, kind: input, shape index: {}]
  %s7 = inlined_call_operand.vmem [shape: f32[64,64], index: 7, kind: input, shape index: {}]
  %s8 = inlined_call_operand.vmem [shape: f32[64,1], index: 8, kind: input, shape index: {}]
  %s9 = inlined_call_operand.vmem [shape: f32[8,64], index: 9, kind: input, shape index: {}]
  %s10 = inlined_call_operand.vmem [shape: f32[8,1], index: 10, kind: input, shape index: {}]
  %s11 = inlined_call_operand.hbm [shape: f32[8,128], index: 11, kind: output, shape index: {}]
  %s12 = sld [smem:[#allocation0]]
  $region54: #{tpu_custom_call.1} parent=0
    _
  %s14 = ssub.s32 1, %s12
  %s15 = scalar_select 0, %s14, %s12
  $region1: #{tpu_custom_call.1} parent=0
    #allocation2 [shape = 'u8[4096]{0}', space=vmem, size = 0x1000, scoped, tag = 'output window, operand 0, single buffered']
    #allocation3 [shape = 's32[1]{0}', space=sflag, size = 0x4, scoped, tag = 'scoped memory for tpu_custom_call.1']
    %16 = vsyncpa [#allocation3], 0
    // Predicated region
    $region2: #{tpu_custom_call.1} parent=1 // pred_check
      _
    $region3: #{tpu_custom_call.1} parent=1 // pred_check_branch
      %18 = sbr.rel (0) target = $region5
    $region4: #{tpu_custom_call.1} parent=1 // pred_region
      _
    $region5: #{tpu_custom_call.1} parent=1 // pred_fallthru
      _
    // Predicated region
    $region6: #{tpu_custom_call.1} parent=1 // pred_check
      _
    $region7: #{tpu_custom_call.1} parent=1 // pred_check_branch
      %20 = sbr.rel (0) target = $region9
    $region8: #{tpu_custom_call.1} parent=1 // pred_region
      _
    $region9: #{tpu_custom_call.1} parent=1 // pred_fallthru
      _
    // Predicated region
    $region10: #{tpu_custom_call.1} parent=1 // pred_check
      _
    $region11: #{tpu_custom_call.1} parent=1 // pred_check_branch
      %22 = sbr.rel (0) target = $region13
    $region12: #{tpu_custom_call.1} parent=1 // pred_region
      _
    $region13: #{tpu_custom_call.1} parent=1 // pred_fallthru
      _
    // Predicated region
    $region14: #{tpu_custom_call.1} parent=1 // pred_check
      _
    $region15: #{tpu_custom_call.1} parent=1 // pred_check_branch
      %24 = sbr.rel (0) target = $region17
    $region16: #{tpu_custom_call.1} parent=1 // pred_region
      _
    $region17: #{tpu_custom_call.1} parent=1 // pred_fallthru
      _
    // Predicated region
    $region18: #{tpu_custom_call.1} parent=1 // pred_check
      _
    $region19: #{tpu_custom_call.1} parent=1 // pred_check_branch
      %26 = sbr.rel (0) target = $region21
    $region20: #{tpu_custom_call.1} parent=1 // pred_region
      _
    $region21: #{tpu_custom_call.1} parent=1 // pred_fallthru
      _
    // Predicated region
    $region22: #{tpu_custom_call.1} parent=1 // pred_check
      _
    $region23: #{tpu_custom_call.1} parent=1 // pred_check_branch
      %28 = sbr.rel (0) target = $region25
    $region24: #{tpu_custom_call.1} parent=1 // pred_region
      _
    $region25: #{tpu_custom_call.1} parent=1 // pred_fallthru
      _
    // Predicated region
    $region26: #{tpu_custom_call.1} parent=1 // pred_check
      _
    $region27: #{tpu_custom_call.1} parent=1 // pred_check_branch
      %30 = sbr.rel (0) target = $region29
    $region28: #{tpu_custom_call.1} parent=1 // pred_region
      _
    $region29: #{tpu_custom_call.1} parent=1 // pred_fallthru
      _
    // Predicated region
    $region30: #{tpu_custom_call.1} parent=1 // pred_check
      _
    $region31: #{tpu_custom_call.1} parent=1 // pred_check_branch
      %32 = sbr.rel (0) target = $region33
    $region32: #{tpu_custom_call.1} parent=1 // pred_region
      _
    $region33: #{tpu_custom_call.1} parent=1 // pred_fallthru
      _
    // Predicated region
    $region34: #{tpu_custom_call.1} parent=1 // pred_check
      _
    $region35: #{tpu_custom_call.1} parent=1 // pred_check_branch
      %34 = sbr.rel (0) target = $region37
    $region36: #{tpu_custom_call.1} parent=1 // pred_region
      _
    $region37: #{tpu_custom_call.1} parent=1 // pred_fallthru
      _
    // Predicated region
    $region38: #{tpu_custom_call.1} parent=1 // pred_check
      _
    $region39: #{tpu_custom_call.1} parent=1 // pred_check_branch
      %36 = sbr.rel (0) target = $region41
    $region40: #{tpu_custom_call.1} parent=1 // pred_region
      _
    $region41: #{tpu_custom_call.1} parent=1 // pred_fallthru
      _
    // Predicated region
    $region42: #{tpu_custom_call.1} parent=1 // pred_check
      _
    $region43: #{tpu_custom_call.1} parent=1 // pred_check_branch
      %38 = sbr.rel (0) target = $region45
    $region44: #{tpu_custom_call.1} parent=1 // pred_region
      _
    $region45: #{tpu_custom_call.1} parent=1 // pred_fallthru
      _
    %v39 = vld [vmem:[%s0] sm:$0x1]
    %v40 = vld [vmem:[%s1] sm:$0x1]
    %v41 = vld [vmem:[%s2] sm:$0xff]
    %v42 = vld [vmem:[%s2 + $0x8] sm:$0xff]
    %v43 = vld [vmem:[%s2 + $0x10] sm:$0xff]
    %v44 = vld [vmem:[%s2 + $0x18] sm:$0xff]
    %v45 = vld [vmem:[%s2 + $0x20] sm:$0xff]
    %v46 = vld [vmem:[%s2 + $0x28] sm:$0xff]
    %v47 = vld [vmem:[%s2 + $0x30] sm:$0xff]
    %v48 = vld [vmem:[%s2 + $0x38] sm:$0xff]
    %50 = vset.pattern.permute.xlu0 0
    %51 = vperm.xlu0 %50, %v41
    %v52 = vpop.permute.xlu0 %51
    %55 = vset.pattern.permute.xlu0 0
    %56 = vperm.xlu0 %55, %v42
    %v57 = vpop.permute.xlu0 %56
    %60 = vset.pattern.permute.xlu0 0
    %61 = vperm.xlu0 %60, %v43
    %v62 = vpop.permute.xlu0 %61
    %65 = vset.pattern.permute.xlu0 0
    %66 = vperm.xlu0 %65, %v44
    %v67 = vpop.permute.xlu0 %66
    %70 = vset.pattern.permute.xlu0 0
    %71 = vperm.xlu0 %70, %v45
    %v72 = vpop.permute.xlu0 %71
    %75 = vset.pattern.permute.xlu0 0
    %76 = vperm.xlu0 %75, %v46
    %v77 = vpop.permute.xlu0 %76
    %80 = vset.pattern.permute.xlu0 0
    %81 = vperm.xlu0 %80, %v47
    %v82 = vpop.permute.xlu0 %81
    %85 = vset.pattern.permute.xlu0 0
    %86 = vperm.xlu0 %85, %v48
    %v87 = vpop.permute.xlu0 %86
    %v90 = vlaneseq
    %v91 = vshrl.u32 %v90, 7
    %v92 = vsub.s32 0, %v91
    %v93 = vrot.slane %v39, %v92
    %v95 = vmul.f32 %v52, %v93
    %v96 = vmul.f32 %v57, %v93
    %v97 = vmul.f32 %v62, %v93
    %v98 = vmul.f32 %v67, %v93
    %v99 = vmul.f32 %v72, %v93
    %v100 = vmul.f32 %v77, %v93
    %v101 = vmul.f32 %v82, %v93
    %v102 = vmul.f32 %v87, %v93
    %v103 = vld [vmem:[%s3] sm:$0xff]
    %v104 = vld [vmem:[%s3 + $0x8] sm:$0xff]
    %v105 = vld [vmem:[%s3 + $0x10] sm:$0xff]
    %v106 = vld [vmem:[%s3 + $0x18] sm:$0xff]
    %v107 = vld [vmem:[%s3 + $0x20] sm:$0xff]
    %v108 = vld [vmem:[%s3 + $0x28] sm:$0xff]
    %v109 = vld [vmem:[%s3 + $0x30] sm:$0xff]
    %v110 = vld [vmem:[%s3 + $0x38] sm:$0xff]
    %112 = vset.pattern.permute.xlu0 0
    %113 = vperm.xlu0 %112, %v103
    %v114 = vpop.permute.xlu0 %113
    %117 = vset.pattern.permute.xlu0 0
    %118 = vperm.xlu0 %117, %v104
    %v119 = vpop.permute.xlu0 %118
    %122 = vset.pattern.permute.xlu0 0
    %123 = vperm.xlu0 %122, %v105
    %v124 = vpop.permute.xlu0 %123
    %127 = vset.pattern.permute.xlu0 0
    %128 = vperm.xlu0 %127, %v106
    %v129 = vpop.permute.xlu0 %128
    %132 = vset.pattern.permute.xlu0 0
    %133 = vperm.xlu0 %132, %v107
    %v134 = vpop.permute.xlu0 %133
    %137 = vset.pattern.permute.xlu0 0
    %138 = vperm.xlu0 %137, %v108
    %v139 = vpop.permute.xlu0 %138
    %142 = vset.pattern.permute.xlu0 0
    %143 = vperm.xlu0 %142, %v109
    %v144 = vpop.permute.xlu0 %143
    %147 = vset.pattern.permute.xlu0 0
    %148 = vperm.xlu0 %147, %v110
    %v149 = vpop.permute.xlu0 %148
    %v152 = vlaneseq
    %v153 = vshrl.u32 %v152, 7
    %v154 = vsub.s32 0, %v153
    %v155 = vrot.slane %v40, %v154
    %v157 = vmul.f32 %v114, %v155
    %v158 = vmul.f32 %v119, %v155
    %v159 = vmul.f32 %v124, %v155
    %v160 = vmul.f32 %v129, %v155
    %v161 = vmul.f32 %v134, %v155
    %v162 = vmul.f32 %v139, %v155
    %v163 = vmul.f32 %v144, %v155
    %v164 = vmul.f32 %v149, %v155
    %v165 = vadd.f32 %v95, %v157
    %v166 = vadd.f32 %v96, %v158
    %v167 = vadd.f32 %v97, %v159
    %v168 = vadd.f32 %v98, %v160
    %v169 = vadd.f32 %v99, %v161
    %v170 = vadd.f32 %v100, %v162
    %v171 = vadd.f32 %v101, %v163
    %v172 = vadd.f32 %v102, %v164
    %v173 = vld [vmem:[%s4] sm:$0xff]
    %v174 = vld [vmem:[%s4 + $0x8] sm:$0xff]
    %v175 = vld [vmem:[%s4 + $0x10] sm:$0xff]
    %v176 = vld [vmem:[%s4 + $0x18] sm:$0xff]
    %v177 = vld [vmem:[%s4 + $0x20] sm:$0xff]
    %v178 = vld [vmem:[%s4 + $0x28] sm:$0xff]
    %v179 = vld [vmem:[%s4 + $0x30] sm:$0xff]
    %v180 = vld [vmem:[%s4 + $0x38] sm:$0xff]
    %182 = vset.pattern.permute.xlu0 0
    %183 = vperm.xlu0 %182, %v173
    %v184 = vpop.permute.xlu0 %183
    %187 = vset.pattern.permute.xlu0 0
    %188 = vperm.xlu0 %187, %v174
    %v189 = vpop.permute.xlu0 %188
    %192 = vset.pattern.permute.xlu0 0
    %193 = vperm.xlu0 %192, %v175
    %v194 = vpop.permute.xlu0 %193
    %197 = vset.pattern.permute.xlu0 0
    %198 = vperm.xlu0 %197, %v176
    %v199 = vpop.permute.xlu0 %198
    %202 = vset.pattern.permute.xlu0 0
    %203 = vperm.xlu0 %202, %v177
    %v204 = vpop.permute.xlu0 %203
    %207 = vset.pattern.permute.xlu0 0
    %208 = vperm.xlu0 %207, %v178
    %v209 = vpop.permute.xlu0 %208
    %212 = vset.pattern.permute.xlu0 0
    %213 = vperm.xlu0 %212, %v179
    %v214 = vpop.permute.xlu0 %213
    %217 = vset.pattern.permute.xlu0 0
    %218 = vperm.xlu0 %217, %v180
    %v219 = vpop.permute.xlu0 %218
    %v221 = vadd.f32 %v165, %v184
    %v222 = vadd.f32 %v166, %v189
    %v223 = vadd.f32 %v167, %v194
    %v224 = vadd.f32 %v168, %v199
    %v225 = vadd.f32 %v169, %v204
    %v226 = vadd.f32 %v170, %v209
    %v227 = vadd.f32 %v171, %v214
    %v228 = vadd.f32 %v172, %v219
    %v229 = vtanh.pop %v221
    %v230 = vtanh.pop %v222
    %v231 = vtanh.pop %v223
    %v232 = vtanh.pop %v224
    %v233 = vtanh.pop %v225
    %v234 = vtanh.pop %v226
    %v235 = vtanh.pop %v227
    %v236 = vtanh.pop %v228
    %v237 = vld [vmem:[%s5] sm:$0xff]
    %v238 = vld [vmem:[%s5 + $0x8] sm:$0xff]
    %v239 = vld [vmem:[%s5 + $0x10] sm:$0xff]
    %v240 = vld [vmem:[%s5 + $0x18] sm:$0xff]
    %v241 = vld [vmem:[%s5 + $0x20] sm:$0xff]
    %v242 = vld [vmem:[%s5 + $0x28] sm:$0xff]
    %v243 = vld [vmem:[%s5 + $0x30] sm:$0xff]
    %v244 = vld [vmem:[%s5 + $0x38] sm:$0xff]
    %v245 = vld [vmem:[%s6] sm:$0xff]
    %v246 = vld [vmem:[%s6 + $0x8] sm:$0xff]
    %v247 = vld [vmem:[%s6 + $0x10] sm:$0xff]
    %v248 = vld [vmem:[%s6 + $0x18] sm:$0xff]
    %v249 = vld [vmem:[%s6 + $0x20] sm:$0xff]
    %v250 = vld [vmem:[%s6 + $0x28] sm:$0xff]
    %v251 = vld [vmem:[%s6 + $0x30] sm:$0xff]
    %v252 = vld [vmem:[%s6 + $0x38] sm:$0xff]
    %254 = vset.pattern.permute.xlu0 0
    %255 = vperm.xlu0 %254, %v245
    %v256 = vpop.permute.xlu0 %255
    %259 = vset.pattern.permute.xlu0 0
    %260 = vperm.xlu0 %259, %v246
    %v261 = vpop.permute.xlu0 %260
    %264 = vset.pattern.permute.xlu0 0
    %265 = vperm.xlu0 %264, %v247
    %v266 = vpop.permute.xlu0 %265
    %269 = vset.pattern.permute.xlu0 0
    %270 = vperm.xlu0 %269, %v248
    %v271 = vpop.permute.xlu0 %270
    %274 = vset.pattern.permute.xlu0 0
    %275 = vperm.xlu0 %274, %v249
    %v276 = vpop.permute.xlu0 %275
    %279 = vset.pattern.permute.xlu0 0
    %280 = vperm.xlu0 %279, %v250
    %v281 = vpop.permute.xlu0 %280
    %284 = vset.pattern.permute.xlu0 0
    %285 = vperm.xlu0 %284, %v251
    %v286 = vpop.permute.xlu0 %285
    %289 = vset.pattern.permute.xlu0 0
    %290 = vperm.xlu0 %289, %v252
    %v291 = vpop.permute.xlu0 %290
    %vm293 = vcmask 523264
    %v295 = vsel %vm293, %v237, 0
    %v298 = vsel %vm293, %v238, 0
    %v301 = vsel %vm293, %v239, 0
    %v304 = vsel %vm293, %v240, 0
    %v307 = vsel %vm293, %v241, 0
    %v310 = vsel %vm293, %v242, 0
    %v313 = vsel %vm293, %v243, 0
    %v316 = vsel %vm293, %v244, 0
    %318 = vmatprep.subr.mxu0 0.0
    %319 = vmatpush1.msra.mxu0 0.0
    %320 = vmatprep.subr.mxu0 0.0
    %321 = vmatpush1.msra.mxu0 0.0
    %322 = vmatprep.subr.mxu0 0.0
    %323 = vmatpush1.msra.mxu0 0.0
    %324 = vmatprep.subr.mxu0 0.0
    %325 = vmatpush1.msra.mxu0 0.0
    %326 = vmatprep.subr.mxu0 0.0
    %327 = vmatpush1.msra.mxu0 0.0
    %328 = vmatprep.subr.mxu0 0.0
    %329 = vmatpush1.msra.mxu0 0.0
    %330 = vmatprep.subr.mxu0 0.0
    %331 = vmatpush1.msra.mxu0 0.0
    %332 = vmatprep.subr.mxu0 0.0
    %333 = vmatpush1.msra.mxu0 0.0
    %334 = vmatprep.subr.mxu0 0.0
    %335 = vmatpush1.msra.mxu0 %v236
    %336 = vmatprep.subr.mxu0 0.0
    %337 = vmatpush1.msra.mxu0 %v235
    %338 = vmatprep.subr.mxu0 0.0
    %339 = vmatpush1.msra.mxu0 %v234
    %340 = vmatprep.subr.mxu0 0.0
    %341 = vmatpush1.msra.mxu0 %v233
    %342 = vmatprep.subr.mxu0 0.0
    %343 = vmatpush1.msra.mxu0 %v232
    %344 = vmatprep.subr.mxu0 0.0
    %345 = vmatpush1.msra.mxu0 %v231
    %346 = vmatprep.subr.mxu0 0.0
    %347 = vmatpush1.msra.mxu0 %v230
    %348 = vmatprep.subr.mxu0 0.0
    %349 = vmatpush1.msra.mxu0 %v229
    %350 = vmatprep.subr.mxu0 0.0
    %351 = vmatpush2.msra.mxu0 0.0
    %352 = vmatprep.subr.mxu0 0.0
    %353 = vmatpush2.msra.mxu0 0.0
    %354 = vmatprep.subr.mxu0 0.0
    %355 = vmatpush2.msra.mxu0 0.0
    %356 = vmatprep.subr.mxu0 0.0
    %357 = vmatpush2.msra.mxu0 0.0
    %358 = vmatprep.subr.mxu0 0.0
    %359 = vmatpush2.msra.mxu0 0.0
    %360 = vmatprep.subr.mxu0 0.0
    %361 = vmatpush2.msra.mxu0 0.0
    %362 = vmatprep.subr.mxu0 0.0
    %363 = vmatpush2.msra.mxu0 0.0
    %364 = vmatprep.subr.mxu0 0.0
    %365 = vmatpush2.msra.mxu0 0.0
    %366 = vmatprep.subr.mxu0 0.0
    %367 = vmatpush2.msra.mxu0 0.0
    %368 = vmatprep.subr.mxu0 0.0
    %369 = vmatpush2.msra.mxu0 0.0
    %370 = vmatprep.subr.mxu0 0.0
    %371 = vmatpush2.msra.mxu0 0.0
    %372 = vmatprep.subr.mxu0 0.0
    %373 = vmatpush2.msra.mxu0 0.0
    %374 = vmatprep.subr.mxu0 0.0
    %375 = vmatpush2.msra.mxu0 0.0
    %376 = vmatprep.subr.mxu0 0.0
    %377 = vmatpush2.msra.mxu0 0.0
    %378 = vmatprep.subr.mxu0 0.0
    %379 = vmatpush2.msra.mxu0 0.0
    %380 = vmatprep.subr.mxu0 0.0
    %381 = vmatpush2.msra.mxu0 0.0
    %382 = vmatprep.mubr.f32.mxu0 0.0
    %383 = vmatmul.mubr.f32.gmra.mxu0 %v295
    %v384 = vpop.f32.mrf.mxu0
    %v385 = vadd.f32 %v256, %v384
    %v386 = vpop.f32.mrf.mxu0
    %387 = vmatprep.mubr.f32.mxu0 0.0
    %388 = vmatmul.mubr.f32.gmra.mxu0 %v298
    %v389 = vpop.f32.mrf.mxu0
    %v390 = vadd.f32 %v261, %v389
    %v391 = vpop.f32.mrf.mxu0
    %392 = vmatprep.mubr.f32.mxu0 0.0
    %393 = vmatmul.mubr.f32.gmra.mxu0 %v301
    %v394 = vpop.f32.mrf.mxu0
    %v395 = vadd.f32 %v266, %v394
    %v396 = vpop.f32.mrf.mxu0
    %397 = vmatprep.mubr.f32.mxu0 0.0
    %398 = vmatmul.mubr.f32.gmra.mxu0 %v304
    %v399 = vpop.f32.mrf.mxu0
    %v400 = vadd.f32 %v271, %v399
    %v401 = vpop.f32.mrf.mxu0
    %402 = vmatprep.mubr.f32.mxu0 0.0
    %403 = vmatmul.mubr.f32.gmra.mxu0 %v307
    %v404 = vpop.f32.mrf.mxu0
    %v405 = vadd.f32 %v276, %v404
    %v406 = vpop.f32.mrf.mxu0
    %407 = vmatprep.mubr.f32.mxu0 0.0
    %408 = vmatmul.mubr.f32.gmra.mxu0 %v310
    %v409 = vpop.f32.mrf.mxu0
    %v410 = vadd.f32 %v281, %v409
    %v411 = vpop.f32.mrf.mxu0
    %412 = vmatprep.mubr.f32.mxu0 0.0
    %413 = vmatmul.mubr.f32.gmra.mxu0 %v313
    %v414 = vpop.f32.mrf.mxu0
    %v415 = vadd.f32 %v286, %v414
    %v416 = vpop.f32.mrf.mxu0
    %417 = vmatprep.mubr.f32.mxu0 0.0
    %418 = vmatmul.mubr.f32.gmra.mxu0 %v316
    %v419 = vpop.f32.mrf.mxu0
    %v420 = vadd.f32 %v291, %v419
    %v421 = vpop.f32.mrf.mxu0
    %422 = vdwg.mxu0
    %v423 = vtanh.pop %v385
    %v424 = vtanh.pop %v390
    %v425 = vtanh.pop %v395
    %v426 = vtanh.pop %v400
    %v427 = vtanh.pop %v405
    %v428 = vtanh.pop %v410
    %v429 = vtanh.pop %v415
    %v430 = vtanh.pop %v420
    %v431 = vld [vmem:[%s7] sm:$0xff]
    %v432 = vld [vmem:[%s7 + $0x8] sm:$0xff]
    %v433 = vld [vmem:[%s7 + $0x10] sm:$0xff]
    %v434 = vld [vmem:[%s7 + $0x18] sm:$0xff]
    %v435 = vld [vmem:[%s7 + $0x20] sm:$0xff]
    %v436 = vld [vmem:[%s7 + $0x28] sm:$0xff]
    %v437 = vld [vmem:[%s7 + $0x30] sm:$0xff]
    %v438 = vld [vmem:[%s7 + $0x38] sm:$0xff]
    %v439 = vld [vmem:[%s8] sm:$0xff]
    %v440 = vld [vmem:[%s8 + $0x8] sm:$0xff]
    %v441 = vld [vmem:[%s8 + $0x10] sm:$0xff]
    %v442 = vld [vmem:[%s8 + $0x18] sm:$0xff]
    %v443 = vld [vmem:[%s8 + $0x20] sm:$0xff]
    %v444 = vld [vmem:[%s8 + $0x28] sm:$0xff]
    %v445 = vld [vmem:[%s8 + $0x30] sm:$0xff]
    %v446 = vld [vmem:[%s8 + $0x38] sm:$0xff]
    %448 = vset.pattern.permute.xlu0 0
    %449 = vperm.xlu0 %448, %v439
    %v450 = vpop.permute.xlu0 %449
    %453 = vset.pattern.permute.xlu0 0
    %454 = vperm.xlu0 %453, %v440
    %v455 = vpop.permute.xlu0 %454
    %458 = vset.pattern.permute.xlu0 0
    %459 = vperm.xlu0 %458, %v441
    %v460 = vpop.permute.xlu0 %459
    %463 = vset.pattern.permute.xlu0 0
    %464 = vperm.xlu0 %463, %v442
    %v465 = vpop.permute.xlu0 %464
    %468 = vset.pattern.permute.xlu0 0
    %469 = vperm.xlu0 %468, %v443
    %v470 = vpop.permute.xlu0 %469
    %473 = vset.pattern.permute.xlu0 0
    %474 = vperm.xlu0 %473, %v444
    %v475 = vpop.permute.xlu0 %474
    %478 = vset.pattern.permute.xlu0 0
    %479 = vperm.xlu0 %478, %v445
    %v480 = vpop.permute.xlu0 %479
    %483 = vset.pattern.permute.xlu0 0
    %484 = vperm.xlu0 %483, %v446
    %v485 = vpop.permute.xlu0 %484
    %v488 = vsel %vm293, %v431, 0
    %v491 = vsel %vm293, %v432, 0
    %v494 = vsel %vm293, %v433, 0
    %v497 = vsel %vm293, %v434, 0
    %v500 = vsel %vm293, %v435, 0
    %v503 = vsel %vm293, %v436, 0
    %v506 = vsel %vm293, %v437, 0
    %v509 = vsel %vm293, %v438, 0
    %511 = vmatprep.subr.mxu0 0.0
    %512 = vmatpush1.msra.mxu0 0.0
    %513 = vmatprep.subr.mxu0 0.0
    %514 = vmatpush1.msra.mxu0 0.0
    %515 = vmatprep.subr.mxu0 0.0
    %516 = vmatpush1.msra.mxu0 0.0
    %517 = vmatprep.subr.mxu0 0.0
    %518 = vmatpush1.msra.mxu0 0.0
    %519 = vmatprep.subr.mxu0 0.0
    %520 = vmatpush1.msra.mxu0 0.0
    %521 = vmatprep.subr.mxu0 0.0
    %522 = vmatpush1.msra.mxu0 0.0
    %523 = vmatprep.subr.mxu0 0.0
    %524 = vmatpush1.msra.mxu0 0.0
    %525 = vmatprep.subr.mxu0 0.0
    %526 = vmatpush1.msra.mxu0 0.0
    %527 = vmatprep.subr.mxu0 0.0
    %528 = vmatpush1.msra.mxu0 %v430
    %529 = vmatprep.subr.mxu0 0.0
    %530 = vmatpush1.msra.mxu0 %v429
    %531 = vmatprep.subr.mxu0 0.0
    %532 = vmatpush1.msra.mxu0 %v428
    %533 = vmatprep.subr.mxu0 0.0
    %534 = vmatpush1.msra.mxu0 %v427
    %535 = vmatprep.subr.mxu0 0.0
    %536 = vmatpush1.msra.mxu0 %v426
    %537 = vmatprep.subr.mxu0 0.0
    %538 = vmatpush1.msra.mxu0 %v425
    %539 = vmatprep.subr.mxu0 0.0
    %540 = vmatpush1.msra.mxu0 %v424
    %541 = vmatprep.subr.mxu0 0.0
    %542 = vmatpush1.msra.mxu0 %v423
    %543 = vmatprep.subr.mxu0 0.0
    %544 = vmatpush2.msra.mxu0 0.0
    %545 = vmatprep.subr.mxu0 0.0
    %546 = vmatpush2.msra.mxu0 0.0
    %547 = vmatprep.subr.mxu0 0.0
    %548 = vmatpush2.msra.mxu0 0.0
    %549 = vmatprep.subr.mxu0 0.0
    %550 = vmatpush2.msra.mxu0 0.0
    %551 = vmatprep.subr.mxu0 0.0
    %552 = vmatpush2.msra.mxu0 0.0
    %553 = vmatprep.subr.mxu0 0.0
    %554 = vmatpush2.msra.mxu0 0.0
    %555 = vmatprep.subr.mxu0 0.0
    %556 = vmatpush2.msra.mxu0 0.0
    %557 = vmatprep.subr.mxu0 0.0
    %558 = vmatpush2.msra.mxu0 0.0
    %559 = vmatprep.subr.mxu0 0.0
    %560 = vmatpush2.msra.mxu0 0.0
    %561 = vmatprep.subr.mxu0 0.0
    %562 = vmatpush2.msra.mxu0 0.0
    %563 = vmatprep.subr.mxu0 0.0
    %564 = vmatpush2.msra.mxu0 0.0
    %565 = vmatprep.subr.mxu0 0.0
    %566 = vmatpush2.msra.mxu0 0.0
    %567 = vmatprep.subr.mxu0 0.0
    %568 = vmatpush2.msra.mxu0 0.0
    %569 = vmatprep.subr.mxu0 0.0
    %570 = vmatpush2.msra.mxu0 0.0
    %571 = vmatprep.subr.mxu0 0.0
    %572 = vmatpush2.msra.mxu0 0.0
    %573 = vmatprep.subr.mxu0 0.0
    %574 = vmatpush2.msra.mxu0 0.0
    %575 = vmatprep.mubr.f32.mxu0 0.0
    %576 = vmatmul.mubr.f32.gmra.mxu0 %v488
    %v577 = vpop.f32.mrf.mxu0
    %v578 = vadd.f32 %v450, %v577
    %v579 = vpop.f32.mrf.mxu0
    %580 = vmatprep.mubr.f32.mxu0 0.0
    %581 = vmatmul.mubr.f32.gmra.mxu0 %v491
    %v582 = vpop.f32.mrf.mxu0
    %v583 = vadd.f32 %v455, %v582
    %v584 = vpop.f32.mrf.mxu0
    %585 = vmatprep.mubr.f32.mxu0 0.0
    %586 = vmatmul.mubr.f32.gmra.mxu0 %v494
    %v587 = vpop.f32.mrf.mxu0
    %v588 = vadd.f32 %v460, %v587
    %v589 = vpop.f32.mrf.mxu0
    %590 = vmatprep.mubr.f32.mxu0 0.0
    %591 = vmatmul.mubr.f32.gmra.mxu0 %v497
    %v592 = vpop.f32.mrf.mxu0
    %v593 = vadd.f32 %v465, %v592
    %v594 = vpop.f32.mrf.mxu0
    %595 = vmatprep.mubr.f32.mxu0 0.0
    %596 = vmatmul.mubr.f32.gmra.mxu0 %v500
    %v597 = vpop.f32.mrf.mxu0
    %v598 = vadd.f32 %v470, %v597
    %v599 = vpop.f32.mrf.mxu0
    %600 = vmatprep.mubr.f32.mxu0 0.0
    %601 = vmatmul.mubr.f32.gmra.mxu0 %v503
    %v602 = vpop.f32.mrf.mxu0
    %v603 = vadd.f32 %v475, %v602
    %v604 = vpop.f32.mrf.mxu0
    %605 = vmatprep.mubr.f32.mxu0 0.0
    %606 = vmatmul.mubr.f32.gmra.mxu0 %v506
    %v607 = vpop.f32.mrf.mxu0
    %v608 = vadd.f32 %v480, %v607
    %v609 = vpop.f32.mrf.mxu0
    %610 = vmatprep.mubr.f32.mxu0 0.0
    %611 = vmatmul.mubr.f32.gmra.mxu0 %v509
    %v612 = vpop.f32.mrf.mxu0
    %v613 = vadd.f32 %v485, %v612
    %v614 = vpop.f32.mrf.mxu0
    %615 = vdwg.mxu0
    %v616 = vtanh.pop %v578
    %v617 = vtanh.pop %v583
    %v618 = vtanh.pop %v588
    %v619 = vtanh.pop %v593
    %v620 = vtanh.pop %v598
    %v621 = vtanh.pop %v603
    %v622 = vtanh.pop %v608
    %v623 = vtanh.pop %v613
    %v624 = vld [vmem:[%s9] sm:$0xff]
    %v625 = vld [vmem:[%s10] sm:$0xff]
    %627 = vset.pattern.permute.xlu0 0
    %628 = vperm.xlu0 %627, %v625
    %v629 = vpop.permute.xlu0 %628
    %v632 = vsel %vm293, %v624, 0
    %634 = vmatprep.subr.mxu0 0.0
    %635 = vmatpush1.msra.mxu0 0.0
    %636 = vmatprep.subr.mxu0 0.0
    %637 = vmatpush1.msra.mxu0 0.0
    %638 = vmatprep.subr.mxu0 0.0
    %639 = vmatpush1.msra.mxu0 0.0
    %640 = vmatprep.subr.mxu0 0.0
    %641 = vmatpush1.msra.mxu0 0.0
    %642 = vmatprep.subr.mxu0 0.0
    %643 = vmatpush1.msra.mxu0 0.0
    %644 = vmatprep.subr.mxu0 0.0
    %645 = vmatpush1.msra.mxu0 0.0
    %646 = vmatprep.subr.mxu0 0.0
    %647 = vmatpush1.msra.mxu0 0.0
    %648 = vmatprep.subr.mxu0 0.0
    %649 = vmatpush1.msra.mxu0 0.0
    %650 = vmatprep.subr.mxu0 0.0
    %651 = vmatpush1.msra.mxu0 %v623
    %652 = vmatprep.subr.mxu0 0.0
    %653 = vmatpush1.msra.mxu0 %v622
    %654 = vmatprep.subr.mxu0 0.0
    %655 = vmatpush1.msra.mxu0 %v621
    %656 = vmatprep.subr.mxu0 0.0
    %657 = vmatpush1.msra.mxu0 %v620
    %658 = vmatprep.subr.mxu0 0.0
    %659 = vmatpush1.msra.mxu0 %v619
    %660 = vmatprep.subr.mxu0 0.0
    %661 = vmatpush1.msra.mxu0 %v618
    %662 = vmatprep.subr.mxu0 0.0
    %663 = vmatpush1.msra.mxu0 %v617
    %664 = vmatprep.subr.mxu0 0.0
    %665 = vmatpush1.msra.mxu0 %v616
    %666 = vmatprep.subr.mxu0 0.0
    %667 = vmatpush2.msra.mxu0 0.0
    %668 = vmatprep.subr.mxu0 0.0
    %669 = vmatpush2.msra.mxu0 0.0
    %670 = vmatprep.subr.mxu0 0.0
    %671 = vmatpush2.msra.mxu0 0.0
    %672 = vmatprep.subr.mxu0 0.0
    %673 = vmatpush2.msra.mxu0 0.0
    %674 = vmatprep.subr.mxu0 0.0
    %675 = vmatpush2.msra.mxu0 0.0
    %676 = vmatprep.subr.mxu0 0.0
    %677 = vmatpush2.msra.mxu0 0.0
    %678 = vmatprep.subr.mxu0 0.0
    %679 = vmatpush2.msra.mxu0 0.0
    %680 = vmatprep.subr.mxu0 0.0
    %681 = vmatpush2.msra.mxu0 0.0
    %682 = vmatprep.subr.mxu0 0.0
    %683 = vmatpush2.msra.mxu0 0.0
    %684 = vmatprep.subr.mxu0 0.0
    %685 = vmatpush2.msra.mxu0 0.0
    %686 = vmatprep.subr.mxu0 0.0
    %687 = vmatpush2.msra.mxu0 0.0
    %688 = vmatprep.subr.mxu0 0.0
    %689 = vmatpush2.msra.mxu0 0.0
    %690 = vmatprep.subr.mxu0 0.0
    %691 = vmatpush2.msra.mxu0 0.0
    %692 = vmatprep.subr.mxu0 0.0
    %693 = vmatpush2.msra.mxu0 0.0
    %694 = vmatprep.subr.mxu0 0.0
    %695 = vmatpush2.msra.mxu0 0.0
    %696 = vmatprep.subr.mxu0 0.0
    %697 = vmatpush2.msra.mxu0 0.0
    %698 = vmatprep.mubr.f32.mxu0 0.0
    %699 = vmatmul.mubr.f32.gmra.mxu0 %v632
    %v700 = vpop.f32.mrf.mxu0
    %v701 = vadd.f32 %v629, %v700
    %v702 = vpop.f32.mrf.mxu0
    %703 = vdwg.mxu0
    %704 = vst [vmem:[#allocation2] sm:$0xff] %v701
    // Predicated region
    $region46: #{tpu_custom_call.1} parent=1 // pred_check
      _
    $region47: #{tpu_custom_call.1} parent=1 // pred_check_branch
      %706 = sbr.rel (0) target = $region49
    $region48: #{tpu_custom_call.1} parent=1 // pred_region
      %s708 = ssub.s32 128, 128
      %709 = vsyncadd [#allocation3], %s708
      %s711 = sshll.u32 [#allocation2], 4
      %s712 = int_to_ptr.vmem [resolvable:$true] %s711
      %714 = dma.vmem_to_hbm [thread:$0]  %s712, 128, %s11, [#allocation3]
    $region49: #{tpu_custom_call.1} parent=1 // pred_fallthru
      _
    // Predicated region
    $region50: #{tpu_custom_call.1} parent=1 // pred_check
      _
    $region51: #{tpu_custom_call.1} parent=1 // pred_check_branch
      %716 = sbr.rel (0) target = $region53
    $region52: #{tpu_custom_call.1} parent=1 // pred_region
      %717 = dma.done [#allocation3], 128
    $region53: #{tpu_custom_call.1} parent=1 // pred_fallthru
      _
    %718 = vsyncpa [#allocation3], 1

</llo_original>
